<compile_context>
chip_gen: v7x
topology: tpu7x:2x2x1
jax: 0.10.0
libtpu: 0.0.40
codegen_flags: <defaults>
</compile_context>

<pallas_src>
import functools

import jax
import jax.numpy as jnp
from jax import lax
from jax.experimental import pallas as pl
from jax.experimental.pallas import tpu as pltpu


def _round_up(x, m):
    return (x + m - 1) // m * m


def _resblock_kernel(x_ref, wg_ref, bg_ref, w1_ref, o_ref, xh_ref, *,
                     K, dilation, left_pad, TL, HALO):
    # x_ref : (C, TL)        streamed time tile of x (batch dim squeezed)
    # wg_ref: (K, 2C, C) bf16 per-tap fused gate weights (conv_a rows, conv_b)
    # bg_ref: (2C, 1)    f32  fused gate bias
    # w1_ref: (C, C)     bf16 1x1 conv weight (no bias)
    # o_ref : (C, TL)         output tile (lane-dense)
    # xh_ref: (C, HALO+TL) bf16 scratch: [carried causal halo | current tile]
    l = pl.program_id(1)
    C = o_ref.shape[0]

    # Zero only the halo head at the start of each batch element (tiny).
    @pl.when(l == 0)
    def _():
        xh_ref[:, 0:HALO] = jnp.zeros((C, HALO), jnp.bfloat16)

    # Stage the current tile next to the halo; cast to bf16 exactly once.
    x_orig = x_ref[...]
    x_bf = x_orig.astype(jnp.bfloat16)
    xh_ref[:, HALO:HALO + TL] = x_bf

    # Gate pre-activations: K accumulated per-tap MXU matmuls, f32 acc.
    g = bg_ref[...]                                  # (2C, 1) broadcast
    for k in range(K):
        off = HALO - left_pad + k * dilation         # static slice offset
        tap = x_bf if off == HALO else xh_ref[:, off:off + TL]
        g = g + jnp.dot(wg_ref[k], tap, preferred_element_type=jnp.float32)

    glu = g[:C] * jax.nn.sigmoid(g[C:])              # (C, TL) f32

    # 1x1 conv (MXU) + residual add (f32, original-precision x).
    skip = jnp.dot(w1_ref[...], glu.astype(jnp.bfloat16),
                   preferred_element_type=jnp.float32)
    o_ref[...] = (x_orig.astype(jnp.float32) + skip).astype(o_ref.dtype)

    # Carry the causal halo (last columns seen so far) for the next tile.
    xh_ref[:, 0:HALO] = xh_ref[:, TL:TL + HALO]


def residual_block_forward(x, wa, ba, wb, bb, w1, *, kernel_size, stride=1,
                           padding=0, dilation=1):
    """x: (N, C, L); wa/wb: (C, C, K); ba/bb: (C,); w1: (C, C, 1) or (C, C)."""
    N, C_in, L = x.shape
    C_out = wa.shape[0]
    K = kernel_size

    assert stride == 1, "only stride=1 is supported"
    assert C_out == C_in, "residual add requires in_channels == out_channels"

    left_pad = dilation + padding              # F.pad + the conv's own pad
    L_out = L + left_pad + padding - dilation * (K - 1)
    assert L_out == L, "residual add requires L_out == L"
    # Causal taps only (no forward reach beyond the current column); together
    # with L_out == L this is the WaveNet config (K == 2, padding == 0).
    assert (K - 1) * dilation <= left_pad, "non-causal configs unsupported"

    # Lane-dense time tile from a conservative VMEM budget so double-buffered
    # x/out tiles + the bf16 staging scratch fit on every TPU generation
    # (v5e 16 MiB scoped default, v7x 64 MiB physical).  Tunable per chip.
    xb = jnp.dtype(x.dtype).itemsize
    per_col = C_in * (2 * xb + 2 * xb + 2)     # 2-buf x, 2-buf out, bf16 stage
    budget = 8 * 1024 * 1024
    tl_cap = max(128, min(2048, (budget // per_col) // 128 * 128))
    TL = min(tl_cap, _round_up(L_out, 128))
    num_tiles = pl.cdiv(L_out, TL)
    HALO = _round_up(left_pad, 128)

    # Per-tap fused gate weights: (K, 2C, C) bf16 (conv_a rows then conv_b).
    wg = jnp.concatenate([wa, wb], axis=0)                     # (2C, C, K)
    wg = jnp.transpose(wg, (2, 0, 1)).astype(jnp.bfloat16)     # (K, 2C, C)
    bg = jnp.concatenate([ba, bb]).reshape(2 * C_out, 1).astype(jnp.float32)
    w1m = w1.reshape(C_out, C_out).astype(jnp.bfloat16)

    kernel = functools.partial(_resblock_kernel, K=K, dilation=dilation,
                               left_pad=left_pad, TL=TL, HALO=HALO)

    out = pl.pallas_call(
        kernel,
        out_shape=jax.ShapeDtypeStruct((N, C_out, L_out), x.dtype),
        grid=(N, num_tiles),
        in_specs=[
            pl.BlockSpec((pl.Squeezed(), C_in, TL), lambda n, l: (n, 0, l)),
            pl.BlockSpec((K, 2 * C_out, C_in), lambda n, l: (0, 0, 0)),
            pl.BlockSpec((2 * C_out, 1), lambda n, l: (0, 0)),
            pl.BlockSpec((C_out, C_out), lambda n, l: (0, 0)),
        ],
        out_specs=pl.BlockSpec((pl.Squeezed(), C_out, TL),
                               lambda n, l: (n, 0, l)),
        scratch_shapes=[pltpu.VMEM((C_in, HALO + TL), jnp.bfloat16)],
        compiler_params=pltpu.CompilerParams(
            dimension_semantics=("parallel", "arbitrary"),
            vmem_limit_bytes=32 * 1024 * 1024),
    )(x, wg, bg, w1m)
    return out


# ----------------------------- references ---------------------------------

def _conv1d_ref(x, w, b, *, stride=1, padding=0, dilation=1):
    out = lax.conv_general_dilated(
        x, w, window_strides=(stride,), padding=[(padding, padding)],
        rhs_dilation=(dilation,), dimension_numbers=("NCH", "OIH", "NCH"))
    if b is not None:
        out = out + b[None, :, None]
    return out


def _residual_block_ref(x, wa, ba, wb, bb, w1, *, kernel_size, stride, padding,
                        dilation, simulate_bf16=False):
    cast = ((lambda t: t.astype(jnp.bfloat16).astype(jnp.float32))
            if simulate_bf16 else (lambda t: t))
    x_pad = jnp.pad(x, ((0, 0), (0, 0), (dilation, 0)))
    a = _conv1d_ref(cast(x_pad), cast(wa), ba, stride=stride, padding=padding,
                    dilation=dilation)
    b = _conv1d_ref(cast(x_pad), cast(wb), bb, stride=stride, padding=padding,
                    dilation=dilation)
    glu = a * jax.nn.sigmoid(b)
    skip = _conv1d_ref(cast(glu), cast(w1), None)
    return x + skip


if __name__ == "__main__":
    # ResidualBlocks config: residual add requires in_channels == out_channels
    # and (with K=2, padding=0) L_out == L.  WaveNet-style: K=2, dilation=2.
    N, C, L = 2, 8, 16
    K, stride, padding, dilation = 2, 1, 0, 2

    key = jax.random.PRNGKey(0)
    kx, kwa, kba, kwb, kbb, kw1 = jax.random.split(key, 6)

    bound = 1.0 / jnp.sqrt(jnp.float32(C * K))   # PyTorch Conv1d init bound
    bound1 = 1.0 / jnp.sqrt(jnp.float32(C))
    x = jax.random.normal(kx, (N, C, L), jnp.float32)
    wa = jax.random.uniform(kwa, (C, C, K), jnp.float32, -bound, bound)
    ba = jax.random.uniform(kba, (C,), jnp.float32, -bound, bound)
    wb = jax.random.uniform(kwb, (C, C, K), jnp.float32, -bound, bound)
    bb = jax.random.uniform(kbb, (C,), jnp.float32, -bound, bound)
    w1 = jax.random.uniform(kw1, (C, C, 1), jnp.float32, -bound1, bound1)

    out = residual_block_forward(x, wa, ba, wb, bb, w1, kernel_size=K,
                                 stride=stride, padding=padding,
                                 dilation=dilation)
    out = jax.block_until_ready(out)
    assert out.shape == (N, C, L), out.shape

    # Tight check vs a reference with identical bf16 rounding of matmul inputs.
    ref_bf16 = _residual_block_ref(x, wa, ba, wb, bb, w1, kernel_size=K,
                                   stride=stride, padding=padding,
                                   dilation=dilation, simulate_bf16=True)
    assert jnp.allclose(out, ref_bf16, atol=1e-3, rtol=1e-3), "mismatch (bf16)"

    # Loose check vs the full-f32 module semantics (bf16 matmul inputs).
    ref_f32 = _residual_block_ref(x, wa, ba, wb, bb, w1, kernel_size=K,
                                  stride=stride, padding=padding,
                                  dilation=dilation, simulate_bf16=False)
    assert jnp.allclose(out, ref_f32, atol=1e-1, rtol=1e-1), "mismatch (f32)"

    print("KERNEL_OK")
</pallas_src>

<mosaic_0001>
module attributes {stable_mosaic.version = 11 : i64} {
  func.func @_resblock_kernel(%arg0: i32, %arg1: i32, %arg2: memref<1x8x128xf32, #tpu.memory_space<vmem>>, %arg3: memref<2x16x8xbf16, #tpu.memory_space<vmem>>, %arg4: memref<16x1xf32, #tpu.memory_space<vmem>>, %arg5: memref<8x8xbf16, #tpu.memory_space<vmem>>, %arg6: memref<1x8x128xf32, #tpu.memory_space<vmem>>, %arg7: memref<8x256xbf16, #tpu.memory_space<vmem>>) attributes {dimension_semantics = [#tpu.dimension_semantics<parallel>, #tpu.dimension_semantics<arbitrary>], iteration_bounds = array<i64: 2, 1>, scalar_prefetch = 0 : i64, scratch_operands = 1 : i64, tpu.core_type = #tpu.core_type<tc>, window_params = [{transform_indices = @transform_0, window_bounds = array<i64: 1, 8, 128>}, {pipeline_mode = #tpu.pipeline_mode<synchronous>, transform_indices = @transform_1, window_bounds = array<i64: 2, 16, 8>}, {pipeline_mode = #tpu.pipeline_mode<synchronous>, transform_indices = @transform_2, window_bounds = array<i64: 16, 1>}, {pipeline_mode = #tpu.pipeline_mode<synchronous>, transform_indices = @transform_3, window_bounds = array<i64: 8, 8>}, {transform_indices = @transform_4, window_bounds = array<i64: 1, 8, 128>}]} {
    %c0_i32 = arith.constant 0 : i32
    %0 = arith.cmpi eq, %arg1, %c0_i32 : i32
    %1 = arith.extui %0 : i1 to i32
    %c0_i32_0 = arith.constant 0 : i32
    %2 = arith.cmpi ne, %1, %c0_i32_0 : i32
    scf.if %2 {
      %cst_24 = arith.constant 0.000000e+00 : bf16
      %35 = vector.broadcast %cst_24 : bf16 to vector<8x128xbf16>
      %c0_25 = arith.constant 0 : index
      %c0_26 = arith.constant 0 : index
      %36 = vector.load %arg7[%c0_25, %c0_26] : memref<8x256xbf16, #tpu.memory_space<vmem>>, vector<8x128xbf16>
      tpu.vector_store %arg7[%c0_25, %c0_26], %35 {strides = array<i32>} : memref<8x256xbf16, #tpu.memory_space<vmem>>, vector<8x128xbf16>,
    } else {
    }
    %c0 = arith.constant 0 : index
    %c0_1 = arith.constant 0 : index
    %c0_2 = arith.constant 0 : index
    %3 = vector.load %arg2[%c0, %c0_1, %c0_2] : memref<1x8x128xf32, #tpu.memory_space<vmem>>, vector<1x8x128xf32>
    %4 = vector.shape_cast %3 : vector<1x8x128xf32> to vector<8x128xf32>
    %5 = arith.truncf %4 : vector<8x128xf32> to vector<8x128xbf16>
    %c0_3 = arith.constant 0 : index
    %c128 = arith.constant 128 : index
    %6 = vector.load %arg7[%c0_3, %c128] : memref<8x256xbf16, #tpu.memory_space<vmem>>, vector<8x128xbf16>
    tpu.vector_store %arg7[%c0_3, %c128], %5 {strides = array<i32>} : memref<8x256xbf16, #tpu.memory_space<vmem>>, vector<8x128xbf16>,
    %c0_4 = arith.constant 0 : index
    %c0_5 = arith.constant 0 : index
    %7 = vector.load %arg4[%c0_4, %c0_5] : memref<16x1xf32, #tpu.memory_space<vmem>>, vector<16x1xf32>
    %c0_6 = arith.constant 0 : index
    %c126 = arith.constant 126 : index
    %8 = vector.load %arg7[%c0_6, %c126] : memref<8x256xbf16, #tpu.memory_space<vmem>>, vector<8x128xbf16>
    %c0_7 = arith.constant 0 : index
    %c0_8 = arith.constant 0 : index
    %c0_9 = arith.constant 0 : index
    %9 = vector.load %arg3[%c0_7, %c0_8, %c0_9] : memref<2x16x8xbf16, #tpu.memory_space<vmem>>, vector<1x16x8xbf16>
    %10 = vector.shape_cast %9 : vector<1x16x8xbf16> to vector<16x8xbf16>
    %cst = arith.constant dense<0.000000e+00> : vector<16x128xf32>
    %11 = tpu.matmul %10, %8, %cst {dimension_numbers = #tpu.dot_dimension_numbers<[1], [0], [0], [1], [0, 0, 1, 1], [], []>} : vector<16x8xbf16>, vector<8x128xbf16>, vector<16x128xf32> -> vector<16x128xf32>
    %12 = vector.broadcast %7 : vector<16x1xf32> to vector<16x128xf32>
    %13 = arith.addf %12, %11 : vector<16x128xf32>
    %c1 = arith.constant 1 : index
    %c0_10 = arith.constant 0 : index
    %c0_11 = arith.constant 0 : index
    %14 = vector.load %arg3[%c1, %c0_10, %c0_11] : memref<2x16x8xbf16, #tpu.memory_space<vmem>>, vector<1x16x8xbf16>
    %15 = vector.shape_cast %14 : vector<1x16x8xbf16> to vector<16x8xbf16>
    %cst_12 = arith.constant dense<0.000000e+00> : vector<16x128xf32>
    %16 = tpu.matmul %15, %5, %cst_12 {dimension_numbers = #tpu.dot_dimension_numbers<[1], [0], [0], [1], [0, 0, 1, 1], [], []>} : vector<16x8xbf16>, vector<8x128xbf16>, vector<16x128xf32> -> vector<16x128xf32>
    %17 = arith.addf %13, %16 : vector<16x128xf32>
    %18 = vector.extract_strided_slice %17 {offsets = [0, 0], sizes = [8, 128], strides = [1, 1]} : vector<16x128xf32> to vector<8x128xf32>
    %19 = vector.extract_strided_slice %17 {offsets = [8, 0], sizes = [8, 128], strides = [1, 1]} : vector<16x128xf32> to vector<8x128xf32>
    %20 = arith.negf %19 : vector<8x128xf32>
    %21 = math.exp %20 : vector<8x128xf32>
    %cst_13 = arith.constant 1.000000e+00 : f32
    %22 = vector.broadcast %cst_13 : f32 to vector<8x128xf32>
    %23 = arith.addf %22, %21 : vector<8x128xf32>
    %24 = arith.divf %22, %23 : vector<8x128xf32>
    %25 = arith.mulf %18, %24 : vector<8x128xf32>
    %c0_14 = arith.constant 0 : index
    %c0_15 = arith.constant 0 : index
    %26 = vector.load %arg5[%c0_14, %c0_15] : memref<8x8xbf16, #tpu.memory_space<vmem>>, vector<8x8xbf16>
    %27 = arith.truncf %25 : vector<8x128xf32> to vector<8x128xbf16>
    %cst_16 = arith.constant dense<0.000000e+00> : vector<8x128xf32>
    %28 = tpu.matmul %26, %27, %cst_16 {dimension_numbers = #tpu.dot_dimension_numbers<[1], [0], [0], [1], [0, 0, 1, 1], [], []>} : vector<8x8xbf16>, vector<8x128xbf16>, vector<8x128xf32> -> vector<8x128xf32>
    %29 = arith.addf %4, %28 : vector<8x128xf32>
    %c0_17 = arith.constant 0 : index
    %c0_18 = arith.constant 0 : index
    %c0_19 = arith.constant 0 : index
    %30 = vector.load %arg6[%c0_17, %c0_18, %c0_19] : memref<1x8x128xf32, #tpu.memory_space<vmem>>, vector<1x8x128xf32>
    %31 = vector.shape_cast %30 : vector<1x8x128xf32> to vector<8x128xf32>
    %32 = vector.shape_cast %29 : vector<8x128xf32> to vector<1x8x128xf32>
    tpu.vector_store %arg6[%c0_17, %c0_18, %c0_19], %32 {strides = array<i32>} : memref<1x8x128xf32, #tpu.memory_space<vmem>>, vector<1x8x128xf32>,
    %c0_20 = arith.constant 0 : index
    %c128_21 = arith.constant 128 : index
    %33 = vector.load %arg7[%c0_20, %c128_21] : memref<8x256xbf16, #tpu.memory_space<vmem>>, vector<8x128xbf16>
    %c0_22 = arith.constant 0 : index
    %c0_23 = arith.constant 0 : index
    %34 = vector.load %arg7[%c0_22, %c0_23] : memref<8x256xbf16, #tpu.memory_space<vmem>>, vector<8x128xbf16>
    tpu.vector_store %arg7[%c0_22, %c0_23], %33 {strides = array<i32>} : memref<8x256xbf16, #tpu.memory_space<vmem>>, vector<8x128xbf16>,
    return
  }
  func.func @transform_0(%arg0: i32, %arg1: i32) -> (i32, i32, i32) {
    %c0_i32 = arith.constant 0 : i32
    %c0_i32_0 = arith.constant 0 : i32
    return %arg0, %c0_i32, %arg1 : i32, i32, i32
  }
  func.func @transform_1(%arg0: i32, %arg1: i32) -> (i32, i32, i32) {
    %c0_i32 = arith.constant 0 : i32
    %c0_i32_0 = arith.constant 0 : i32
    %c0_i32_1 = arith.constant 0 : i32
    %c0_i32_2 = arith.constant 0 : i32
    return %c0_i32, %c0_i32_0, %c0_i32_1 : i32, i32, i32
  }
  func.func @transform_2(%arg0: i32, %arg1: i32) -> (i32, i32) {
    %c0_i32 = arith.constant 0 : i32
    %c0_i32_0 = arith.constant 0 : i32
    %c0_i32_1 = arith.constant 0 : i32
    return %c0_i32, %c0_i32_0 : i32, i32
  }
  func.func @transform_3(%arg0: i32, %arg1: i32) -> (i32, i32) {
    %c0_i32 = arith.constant 0 : i32
    %c0_i32_0 = arith.constant 0 : i32
    %c0_i32_1 = arith.constant 0 : i32
    return %c0_i32, %c0_i32_0 : i32, i32
  }
  func.func @transform_4(%arg0: i32, %arg1: i32) -> (i32, i32, i32) {
    %c0_i32 = arith.constant 0 : i32
    %c0_i32_0 = arith.constant 0 : i32
    return %arg0, %c0_i32, %arg1 : i32, i32, i32
  }
}

</mosaic_0001>

<llo_original>
// kernel: tpu_custom_call.1
$region0: #{tpu_custom_call.1}
  #allocation0 [shape = 'u32[]', space=smem, size = 0x4, offset = 0x4, fixed_abs, tag = 'smem constant byte address 0x4 - core index']
  #allocation1 [shape = 'u32[144,128]{1,0:T(1,128)}', space=vmem, size = 0x12000, scoped, tag = 'internal scratch']
  #allocation2 [shape = 'bf16[8,256]{1,0:T(8,128)(2,1)}', space=vmem, size = 0x1000, scoped, tag = 'scratch operand']
  %s0 = inlined_call_operand.vmem [shape: f32[2,8,16], index: 0, kind: input, shape index: {}]
  %s1 = inlined_call_operand.vmem [shape: bf16[2,16,8], index: 1, kind: input, shape index: {}]
  %s2 = inlined_call_operand.vmem [shape: f32[16,1], index: 2, kind: input, shape index: {}]
  %s3 = inlined_call_operand.vmem [shape: bf16[8,8], index: 3, kind: input, shape index: {}]
  %s4 = inlined_call_operand.hbm [shape: f32[2,8,16], index: 4, kind: output, shape index: {}]
  %s5 = sld [smem:[#allocation0]]
  $region53: #{tpu_custom_call.1} parent=0
    _
  %s7 = ssub.s32 1, %s5
  %s8 = scalar_select 0, %s7, %s5
  $region1: #{tpu_custom_call.1} parent=0
    #allocation3 [shape = 'u8[8192]{0}', space=vmem, size = 0x2000, scoped, tag = 'output window, operand 0']
    #allocation4 [shape = 's32[2]{0}', space=sflag, size = 0x8, scoped, tag = 'scoped memory for tpu_custom_call.1']
    %9 = vsyncpa [#allocation4], 0
    %s10 = scalar_lea.sflag [#allocation4], 1
    %11 = vsyncpa %s10, 0
    loop: start=0, step=1, limit=4
    $region2: #{tpu_custom_call.1} parent=1 // loop_pre_header
      _
    $region3: #{tpu_custom_call.1} parent=1 // loop_header
      %s13 = sphi 0, %s17
      %p14 = scmp.ge.s32.totalorder %s13, 4
      %s20 = sphi 0, %s32
      %s21 = sphi 0, %s28
      %s22 = sphi 0, %s20
      %s23 = sphi 0, %s21
      %s24 = sphi 0, %s22
      %s25 = sphi 0, %s23
      %s37 = sphi 0, %s39
      %s40 = sphi 0, %s37
      %s41 = sphi 0, %s40
      %s57 = sphi 0, %s41
      %s61 = sphi 0, %s61
      %s63 = sphi 0, %s61
      %s64 = sphi 0, %s63
      %s78 = sphi 0, %s64
      %s82 = sphi 0, %s82
      %s84 = sphi 0, %s82
      %s85 = sphi 0, %s84
      %s99 = sphi 0, %s85
      %s103 = sphi 0, %s103
      %s105 = sphi 0, %s103
      %s106 = sphi 0, %s105
      %s120 = sphi 0, %s106
      %s128 = sphi 0, %s130
      %s131 = sphi 0, %s128
      %s132 = sphi 0, %s131
      %s148 = sphi 0, %s132
    $region4: #{tpu_custom_call.1} parent=1 // loop_header_branch
      %16 = sbr.rel (%p14) target = $region8
    $region5: #{tpu_custom_call.1} parent=1 // loop_body
      %s18 = ssub.s32 %s13, 1
      %s19 = ssub.s32 %s13, 2
      %s26 = sadd.s32 1, %s21
      %p27 = scmp.ge.s32.totalorder %s26, 1
      %s28 = scalar_select %p27, 0, %s26
      %s29 = sadd.s32 1, %s20
      %s30 = scalar_select %p27, %s29, %s20
      %p31 = scmp.ge.s32.totalorder %s30, 2
      %s32 = scalar_select %p31, 0, %s30
      %s33 = ssub.s32 %s20, %s32
      %s34 = ssub.s32 %s21, %s28
      %s35 = sor.u32 %s33, %s34
      %p36 = scmp.eq.s32.totalorder %s35, 0
      %s38 = sadd.s32 %s37, 1
      %s39 = scalar_select %p36, %s37, %s38
      %p42 = pneg %p36
      %p43 = scmp.eq.s32.totalorder %s13, 1
      %p44 = por %p42, %p43
      %p45 = scmp.ne.s32.totalorder %s37, %s40
      %p46 = scmp.eq.s32.totalorder %s13, 0
      %p47 = por %p45, %p46
      %p48 = scmp.ne.s32.totalorder %s37, %s40
      %p49 = scmp.eq.s32.totalorder %s18, 1
      %p50 = por %p48, %p49
      %p51 = scmp.ne.s32.totalorder %s40, %s41
      %p52 = scmp.eq.s32.totalorder %s18, 0
      %p53 = por %p51, %p52
      %p54 = scmp.ne.s32.totalorder %s40, %s41
      %p55 = scmp.eq.s32.totalorder %s19, 1
      %p56 = por %p54, %p55
      %p58 = scmp.ne.s32.totalorder %s41, %s57
      %p59 = scmp.eq.s32.totalorder %s19, 0
      %p60 = por %p58, %p59
      %s62 = sadd.s32 %s61, 1
      %p65 = scmp.eq.s32.totalorder %s13, 1
      %p66 = scmp.ne.s32.totalorder %s61, %s63
      %p67 = scmp.eq.s32.totalorder %s13, 0
      %p68 = por %p66, %p67
      %p69 = scmp.ne.s32.totalorder %s61, %s63
      %p70 = scmp.eq.s32.totalorder %s18, 1
      %p71 = por %p69, %p70
      %p72 = scmp.ne.s32.totalorder %s63, %s64
      %p73 = scmp.eq.s32.totalorder %s18, 0
      %p74 = por %p72, %p73
      %p75 = scmp.ne.s32.totalorder %s63, %s64
      %p76 = scmp.eq.s32.totalorder %s19, 1
      %p77 = por %p75, %p76
      %p79 = scmp.ne.s32.totalorder %s64, %s78
      %p80 = scmp.eq.s32.totalorder %s19, 0
      %p81 = por %p79, %p80
      %s83 = sadd.s32 %s82, 1
      %p86 = scmp.eq.s32.totalorder %s13, 1
      %p87 = scmp.ne.s32.totalorder %s82, %s84
      %p88 = scmp.eq.s32.totalorder %s13, 0
      %p89 = por %p87, %p88
      %p90 = scmp.ne.s32.totalorder %s82, %s84
      %p91 = scmp.eq.s32.totalorder %s18, 1
      %p92 = por %p90, %p91
      %p93 = scmp.ne.s32.totalorder %s84, %s85
      %p94 = scmp.eq.s32.totalorder %s18, 0
      %p95 = por %p93, %p94
      %p96 = scmp.ne.s32.totalorder %s84, %s85
      %p97 = scmp.eq.s32.totalorder %s19, 1
      %p98 = por %p96, %p97
      %p100 = scmp.ne.s32.totalorder %s85, %s99
      %p101 = scmp.eq.s32.totalorder %s19, 0
      %p102 = por %p100, %p101
      %s104 = sadd.s32 %s103, 1
      %p107 = scmp.eq.s32.totalorder %s13, 1
      %p108 = scmp.ne.s32.totalorder %s103, %s105
      %p109 = scmp.eq.s32.totalorder %s13, 0
      %p110 = por %p108, %p109
      %p111 = scmp.ne.s32.totalorder %s103, %s105
      %p112 = scmp.eq.s32.totalorder %s18, 1
      %p113 = por %p111, %p112
      %p114 = scmp.ne.s32.totalorder %s105, %s106
      %p115 = scmp.eq.s32.totalorder %s18, 0
      %p116 = por %p114, %p115
      %p117 = scmp.ne.s32.totalorder %s105, %s106
      %p118 = scmp.eq.s32.totalorder %s19, 1
      %p119 = por %p117, %p118
      %p121 = scmp.ne.s32.totalorder %s106, %s120
      %p122 = scmp.eq.s32.totalorder %s19, 0
      %p123 = por %p121, %p122
      %s124 = ssub.s32 %s20, %s32
      %s125 = ssub.s32 %s21, %s28
      %s126 = sor.u32 %s124, %s125
      %p127 = scmp.eq.s32.totalorder %s126, 0
      %s129 = sadd.s32 %s128, 1
      %s130 = scalar_select %p127, %s128, %s129
      %p133 = pneg %p127
      %p134 = scmp.eq.s32.totalorder %s13, 1
      %p135 = por %p133, %p134
      %p136 = scmp.ne.s32.totalorder %s128, %s131
      %p137 = scmp.eq.s32.totalorder %s13, 0
      %p138 = por %p136, %p137
      %p139 = scmp.ne.s32.totalorder %s128, %s131
      %p140 = scmp.eq.s32.totalorder %s18, 1
      %p141 = por %p139, %p140
      %p142 = scmp.ne.s32.totalorder %s131, %s132
      %p143 = scmp.eq.s32.totalorder %s18, 0
      %p144 = por %p142, %p143
      %p145 = scmp.ne.s32.totalorder %s131, %s132
      %p146 = scmp.eq.s32.totalorder %s19, 1
      %p147 = por %p145, %p146
      %p149 = scmp.ne.s32.totalorder %s132, %s148
      %p150 = scmp.eq.s32.totalorder %s19, 0
      %p151 = por %p149, %p150
      %p152 = scmp.le.s32.totalorder 1, %s13
      %p153 = scmp.lt.s32.totalorder %s13, 3
      %p154 = pnand %p152, %p153
      %p155 = pneg %p154
      // Predicated region
      $region9: #{tpu_custom_call.1} parent=5 // pred_check
        _
      $region10: #{tpu_custom_call.1} parent=5 // pred_check_branch
        %157 = sbr.rel (%p154) target = $region12
      $region11: #{tpu_custom_call.1} parent=5 // pred_region
        %s158 = ssub.s32 %s13, 1
        // Predicated region
        $region13: #{tpu_custom_call.1} parent=11 // pred_check
          %p159 = pneg %p74
        $region14: #{tpu_custom_call.1} parent=11 // pred_check_branch
          %161 = sbr.rel (%p159) target = $region16
        $region15: #{tpu_custom_call.1} parent=11 // pred_region
          _
        $region16: #{tpu_custom_call.1} parent=11 // pred_fallthru
          _
        // Predicated region
        $region17: #{tpu_custom_call.1} parent=11 // pred_check
          %p162 = pneg %p95
        $region18: #{tpu_custom_call.1} parent=11 // pred_check_branch
          %164 = sbr.rel (%p162) target = $region20
        $region19: #{tpu_custom_call.1} parent=11 // pred_region
          _
        $region20: #{tpu_custom_call.1} parent=11 // pred_fallthru
          _
        // Predicated region
        $region21: #{tpu_custom_call.1} parent=11 // pred_check
          %p165 = pneg %p116
        $region22: #{tpu_custom_call.1} parent=11 // pred_check_branch
          %167 = sbr.rel (%p165) target = $region24
        $region23: #{tpu_custom_call.1} parent=11 // pred_region
          _
        $region24: #{tpu_custom_call.1} parent=11 // pred_fallthru
          _
      $region12: #{tpu_custom_call.1} parent=5 // pred_fallthru
        _
      %p168 = scmp.lt.s32.totalorder %s13, 2
      // Predicated region
      $region25: #{tpu_custom_call.1} parent=5 // pred_check
        %p169 = pneg %p168
      $region26: #{tpu_custom_call.1} parent=5 // pred_check_branch
        %171 = sbr.rel (%p169) target = $region28
      $region27: #{tpu_custom_call.1} parent=5 // pred_region
        // Predicated region
        $region29: #{tpu_custom_call.1} parent=27 // pred_check
          %p172 = pneg %p47
        $region30: #{tpu_custom_call.1} parent=27 // pred_check_branch
          %174 = sbr.rel (%p172) target = $region32
        $region31: #{tpu_custom_call.1} parent=27 // pred_region
          %p175 = scmp.lt.s32.totalorder %s20, 1
          %s176 = scalar_select %p175, %s20, 1
          %p177 = scmp.lt.s32.totalorder %s21, 0
          %s178 = scalar_select %p177, %s21, 0
          %s179 = sadd.s32 %s178, %s176
          %s180 = smul.addr %s179, 8
          %s181 = scalar_lea.vmem %s0, %s180
        $region32: #{tpu_custom_call.1} parent=27 // pred_fallthru
          _
      $region28: #{tpu_custom_call.1} parent=5 // pred_fallthru
        _
      %p182 = scmp.le.s32.totalorder 1, %s13
      %p183 = scmp.lt.s32.totalorder %s13, 3
      %p184 = pnand %p182, %p183
      %p185 = pneg %p184
      // Predicated region
      $region33: #{tpu_custom_call.1} parent=5 // pred_check
        _
      $region34: #{tpu_custom_call.1} parent=5 // pred_check_branch
        %187 = sbr.rel (%p184) target = $region36
      $region35: #{tpu_custom_call.1} parent=5 // pred_region
        %s188 = ssub.s32 %s13, 1
        %p189 = scmp.lt.s32.totalorder %s22, 1
        %s190 = scalar_select %p189, %s22, 1
        %p191 = scmp.lt.s32.totalorder %s23, 0
        %s192 = scalar_select %p191, %s23, 0
        %s193 = sadd.s32 %s192, %s190
        %s194 = smul.addr %s193, 8
        %s195 = scalar_lea.vmem %s0, %s194
        %p196 = pneg %p53
        %p197 = pneg %p50
        %p198 = pneg %p74
        %p199 = pneg %p71
        %p200 = pneg %p95
        %p201 = pneg %p92
        %p202 = pneg %p116
        %p203 = pneg %p113
        %p204 = pneg %p144
        %p205 = pneg %p141
        %s206 = sand.u32 %s131, 1
        %s207 = scalar_lea.sflag [#allocation4], %s206
        %s208 = sand.u32 %s131, 1
        %s209 = smul.addr %s208, 8
        %s210 = scalar_lea.vmem [#allocation3], %s209
        %p211 = scmp.lt.s32.totalorder %s22, 1
        %s212 = scalar_select %p211, %s22, 1
        %p213 = scmp.lt.s32.totalorder %s23, 0
        %s214 = scalar_select %p213, %s23, 0
        %s215 = sadd.s32 %s214, %s212
        %s216 = smul.addr %s215, 8
        %s217 = scalar_lea.vmem %s0, %s216
        %p219 = scmp.eq.s32.totalorder %s23, 0
        // Predicated region
        $region37: #{tpu_custom_call.1} parent=35 // pred_check
          %p220 = pneg %p219
        $region38: #{tpu_custom_call.1} parent=35 // pred_check_branch
          %222 = sbr.rel (%p220) target = $region40
        $region39: #{tpu_custom_call.1} parent=35 // pred_region
          %223 = vst [vmem:[#allocation2] sm:$0xf] 0
        $region40: #{tpu_custom_call.1} parent=35 // pred_fallthru
          _
        %v224 = vld [vmem:[%s217] sm:$0xff]
        %v225 = vpack.c.bf16 %v224, %v224
        %226 = vst [vmem:[#allocation2 + $0x4] sm:$0xf] %v225
        %v227 = vld [vmem:[%s2] sm:$0xff]
        %v228 = vld [vmem:[%s2 + $0x8] sm:$0xff]
        %v229 = vld [vmem:[#allocation2] sm:$0xff]
        %v230 = vld [vmem:[%s1] sm:$0xf]
        %v231 = vld [vmem:[%s1 + $0x4] sm:$0xf]
        %v234 = vunpack.c.l.b16 %v230
        %v235 = vunpack.c.l.b16 %v231
        %v236 = vpack.c.b16 %v235, %v234
        %v238 = vunpack.c.l.b16 %v229
        %v239 = vunpack.c.h.b16 %v229
        %v240 = vpack.c.b16 %v238, %v238
        %v241 = vpack.c.b16 %v239, %v239
        %242 = vrot.lane.b32.xlu0 %v240, 2
        %v243 = vpop.permute.xlu0 %242
        %244 = vrot.lane.b32.xlu0 %v241, 2
        %v245 = vpop.permute.xlu0 %244
        %vm246 = vcmask 15360
        %v247 = vsel %vm246, %v243, %v245
        %vm248 = vcmask 64512
        %v250 = vsel %vm248, %v236, 0
        %vm252 = vcmask 1043456
        %v254 = vsel %vm252, %v247, 0
        %256 = vmatprep.subr.bf16.mxu0 0
        %257 = vmatpush1.bf16.msra.mxu0 %v254
        %258 = vmatprep.subr.bf16.mxu0 0
        %259 = vmatpush1.bf16.msra.mxu0 0
        %260 = vmatprep.subr.bf16.mxu0 0
        %261 = vmatpush1.bf16.msra.mxu0 0
        %262 = vmatprep.subr.bf16.mxu0 0
        %263 = vmatpush1.bf16.msra.mxu0 0
        %264 = vmatprep.subr.bf16.mxu0 0
        %265 = vmatpush1.bf16.msra.mxu0 0
        %266 = vmatprep.subr.bf16.mxu0 0
        %267 = vmatpush1.bf16.msra.mxu0 0
        %268 = vmatprep.subr.bf16.mxu0 0
        %269 = vmatpush1.bf16.msra.mxu0 0
        %270 = vmatprep.subr.bf16.mxu0 0
        %271 = vmatpush1.bf16.msra.mxu0 0
        %272 = vmatprep.subr.bf16.mxu0 0
        %273 = vmatpush1.bf16.msra.mxu0 0
        %274 = vmatprep.subr.bf16.mxu0 0
        %275 = vmatpush1.bf16.msra.mxu0 0
        %276 = vmatprep.subr.bf16.mxu0 0
        %277 = vmatpush1.bf16.msra.mxu0 0
        %278 = vmatprep.subr.bf16.mxu0 0
        %279 = vmatpush1.bf16.msra.mxu0 0
        %280 = vmatprep.subr.bf16.mxu0 0
        %281 = vmatpush1.bf16.msra.mxu0 0
        %282 = vmatprep.subr.bf16.mxu0 0
        %283 = vmatpush1.bf16.msra.mxu0 0
        %284 = vmatprep.subr.bf16.mxu0 0
        %285 = vmatpush1.bf16.msra.mxu0 0
        %286 = vmatprep.subr.bf16.mxu0 0
        %287 = vmatpush1.bf16.msra.mxu0 0
        %288 = vmatprep.mubr.bf16.mxu0 0
        %289 = vmatmul.mubr.bf16.gmra.mrb[0].mxu0 %v250
        %v290 = vpop.f32.mrb[0].mxu0
        %v291 = vadd.f32 0.0, %v290
        %v292 = vpop.f32.mrb[0].mxu0
        %v293 = vpop.f32.mrb[0].mxu0
        %v294 = vadd.f32 0.0, %v293
        %v295 = vpop.f32.mrb[0].mxu0
        %296 = vdwg.mxu0
        %298 = vset.pattern.permute.xlu0 0
        %299 = vperm.xlu0 %298, %v227
        %v300 = vpop.permute.xlu0 %299
        %303 = vset.pattern.permute.xlu0 0
        %304 = vperm.xlu0 %303, %v228
        %v305 = vpop.permute.xlu0 %304
        %v307 = vadd.f32 %v300, %v291
        %v308 = vadd.f32 %v305, %v294
        %s309 = scalar_lea.vmem %s1, 8
        %v310 = vld [vmem:[%s309] sm:$0xf]
        %v311 = vld [vmem:[%s309 + $0x4] sm:$0xf]
        %v314 = vunpack.c.l.b16 %v310
        %v315 = vunpack.c.l.b16 %v311
        %v316 = vpack.c.b16 %v315, %v314
        %v318 = vsel %vm248, %v316, 0
        %v321 = vsel %vm252, %v225, 0
        %323 = vmatprep.subr.bf16.mxu0 0
        %324 = vmatpush1.bf16.msra.mxu0 %v321
        %325 = vmatprep.subr.bf16.mxu0 0
        %326 = vmatpush1.bf16.msra.mxu0 0
        %327 = vmatprep.subr.bf16.mxu0 0
        %328 = vmatpush1.bf16.msra.mxu0 0
        %329 = vmatprep.subr.bf16.mxu0 0
        %330 = vmatpush1.bf16.msra.mxu0 0
        %331 = vmatprep.subr.bf16.mxu0 0
        %332 = vmatpush1.bf16.msra.mxu0 0
        %333 = vmatprep.subr.bf16.mxu0 0
        %334 = vmatpush1.bf16.msra.mxu0 0
        %335 = vmatprep.subr.bf16.mxu0 0
        %336 = vmatpush1.bf16.msra.mxu0 0
        %337 = vmatprep.subr.bf16.mxu0 0
        %338 = vmatpush1.bf16.msra.mxu0 0
        %339 = vmatprep.subr.bf16.mxu0 0
        %340 = vmatpush1.bf16.msra.mxu0 0
        %341 = vmatprep.subr.bf16.mxu0 0
        %342 = vmatpush1.bf16.msra.mxu0 0
        %343 = vmatprep.subr.bf16.mxu0 0
        %344 = vmatpush1.bf16.msra.mxu0 0
        %345 = vmatprep.subr.bf16.mxu0 0
        %346 = vmatpush1.bf16.msra.mxu0 0
        %347 = vmatprep.subr.bf16.mxu0 0
        %348 = vmatpush1.bf16.msra.mxu0 0
        %349 = vmatprep.subr.bf16.mxu0 0
        %350 = vmatpush1.bf16.msra.mxu0 0
        %351 = vmatprep.subr.bf16.mxu0 0
        %352 = vmatpush1.bf16.msra.mxu0 0
        %353 = vmatprep.subr.bf16.mxu0 0
        %354 = vmatpush1.bf16.msra.mxu0 0
        %355 = vmatprep.mubr.bf16.mxu0 0
        %356 = vmatmul.mubr.bf16.gmra.mrb[0].mxu0 %v318
        %v357 = vpop.f32.mrb[0].mxu0
        %v358 = vadd.f32 0.0, %v357
        %v359 = vpop.f32.mrb[0].mxu0
        %v360 = vpop.f32.mrb[0].mxu0
        %v361 = vadd.f32 0.0, %v360
        %v362 = vpop.f32.mrb[0].mxu0
        %363 = vdwg.mxu0
        %v364 = vadd.f32 %v307, %v358
        %v365 = vadd.f32 %v308, %v361
        %v366 = vxor.u32 %v365, 2147483648
        %v367 = vmul.f32 %v366, 1.442695
        %v368 = vpow.pop %v367
        %v369 = vadd.f32 %v368, 1.0
        %v370 = vrcp.pop %v369
        %v371 = vmul.f32 1.0, %v370
        %v372 = vmul.f32 %v364, %v371
        %v373 = vld [vmem:[%s3] sm:$0xf]
        %v374 = vpack.c.bf16 %v372, %v372
        %v376 = vsel %vm248, %v373, 0
        %v379 = vsel %vm252, %v374, 0
        %381 = vmatprep.subr.bf16.mxu0 0
        %382 = vmatpush1.bf16.msra.mxu0 %v379
        %383 = vmatprep.subr.bf16.mxu0 0
        %384 = vmatpush1.bf16.msra.mxu0 0
        %385 = vmatprep.subr.bf16.mxu0 0
        %386 = vmatpush1.bf16.msra.mxu0 0
        %387 = vmatprep.subr.bf16.mxu0 0
        %388 = vmatpush1.bf16.msra.mxu0 0
        %389 = vmatprep.subr.bf16.mxu0 0
        %390 = vmatpush1.bf16.msra.mxu0 0
        %391 = vmatprep.subr.bf16.mxu0 0
        %392 = vmatpush1.bf16.msra.mxu0 0
        %393 = vmatprep.subr.bf16.mxu0 0
        %394 = vmatpush1.bf16.msra.mxu0 0
        %395 = vmatprep.subr.bf16.mxu0 0
        %396 = vmatpush1.bf16.msra.mxu0 0
        %397 = vmatprep.subr.bf16.mxu0 0
        %398 = vmatpush1.bf16.msra.mxu0 0
        %399 = vmatprep.subr.bf16.mxu0 0
        %400 = vmatpush1.bf16.msra.mxu0 0
        %401 = vmatprep.subr.bf16.mxu0 0
        %402 = vmatpush1.bf16.msra.mxu0 0
        %403 = vmatprep.subr.bf16.mxu0 0
        %404 = vmatpush1.bf16.msra.mxu0 0
        %405 = vmatprep.subr.bf16.mxu0 0
        %406 = vmatpush1.bf16.msra.mxu0 0
        %407 = vmatprep.subr.bf16.mxu0 0
        %408 = vmatpush1.bf16.msra.mxu0 0
        %409 = vmatprep.subr.bf16.mxu0 0
        %410 = vmatpush1.bf16.msra.mxu0 0
        %411 = vmatprep.subr.bf16.mxu0 0
        %412 = vmatpush1.bf16.msra.mxu0 0
        %413 = vmatprep.mubr.bf16.mxu0 0
        %414 = vmatmul.mubr.bf16.gmra.mrb[0].mxu0 %v376
        %v415 = vpop.f32.mrb[0].mxu0
        %v416 = vadd.f32 0.0, %v415
        %v417 = vpop.f32.mrb[0].mxu0
        %v418 = vpop.f32.mrb[0].mxu0
        %v419 = vpop.f32.mrb[0].mxu0
        %420 = vdwg.mxu0
        %v421 = vadd.f32 %v224, %v416
        %422 = vst [vmem:[%s210] sm:$0xff] %v421
        %v423 = vld [vmem:[#allocation2 + $0x4] sm:$0xf]
        %424 = vst [vmem:[#allocation2] sm:$0xf] %v423
        %s425 = sand.u32 %s131, 1
        %s426 = scalar_lea.sflag [#allocation4], %s425
        %s427 = sand.u32 %s131, 1
        %s428 = smul.addr %s427, 8
        %s429 = scalar_lea.vmem [#allocation3], %s428
        // Predicated region
        $region41: #{tpu_custom_call.1} parent=35 // pred_check
          %p430 = pneg %p141
        $region42: #{tpu_custom_call.1} parent=35 // pred_check_branch
          %432 = sbr.rel (%p430) target = $region44
        $region43: #{tpu_custom_call.1} parent=35 // pred_region
          %s434 = ssub.s32 128, 128
          %435 = vsyncadd %s426, %s434
          %s436 = sadd.s32 %s23, %s22
          %s437 = smul.addr %s436, 128
          %s438 = scalar_lea.hbm %s4, %s437
          %s440 = sshll.u32 %s429, 4
          %s441 = int_to_ptr.vmem [resolvable:$true] %s440
          %443 = dma.vmem_to_hbm [thread:$0]  %s441, 128, %s438, %s426
        $region44: #{tpu_custom_call.1} parent=35 // pred_fallthru
          _
      $region36: #{tpu_custom_call.1} parent=5 // pred_fallthru
        _
      %p444 = scmp.le.s32.totalorder 2, %s13
      // Predicated region
      $region45: #{tpu_custom_call.1} parent=5 // pred_check
        %p445 = pneg %p444
      $region46: #{tpu_custom_call.1} parent=5 // pred_check_branch
        %447 = sbr.rel (%p445) target = $region48
      $region47: #{tpu_custom_call.1} parent=5 // pred_region
        %s448 = ssub.s32 %s13, 2
        // Predicated region
        $region49: #{tpu_custom_call.1} parent=47 // pred_check
          %p449 = pneg %p147
        $region50: #{tpu_custom_call.1} parent=47 // pred_check_branch
          %451 = sbr.rel (%p449) target = $region52
        $region51: #{tpu_custom_call.1} parent=47 // pred_region
          %s452 = sand.u32 %s132, 1
          %s453 = scalar_lea.sflag [#allocation4], %s452
          %s454 = sand.u32 %s132, 1
          %s455 = smul.addr %s454, 8
          %s456 = scalar_lea.vmem [#allocation3], %s455
          %457 = dma.done %s453, 128
        $region52: #{tpu_custom_call.1} parent=47 // pred_fallthru
          _
      $region48: #{tpu_custom_call.1} parent=5 // pred_fallthru
        _
    $region6: #{tpu_custom_call.1} parent=1 // loop_footer
      %s17 = sadd.s32 1, %s13
    $region7: #{tpu_custom_call.1} parent=1 // loop_footer_branch
      %12 = sbr.rel target = $region3
    $region8: #{tpu_custom_call.1} parent=1 // loop_exit
      _
    %458 = vsyncpa [#allocation4], 1
    %s459 = scalar_lea.sflag [#allocation4], 1
    %460 = vsyncpa %s459, 1

</llo_original>
